<compile_context>
chip_gen: v7x
topology: tpu7x:2x2x1
jax: 0.10.0
libtpu: 0.0.40
codegen_flags: <defaults>
</compile_context>

<pallas_src>
import functools
import math

import jax
import jax.numpy as jnp
from jax.experimental import pallas as pl
from jax.experimental.pallas import tpu as pltpu


# --------------------------------- helpers --------------------------------- #

def _round_up(x, m):
    return (x + m - 1) // m * m


def _vmem_limit_bytes(working_set_bytes):
    """Derive the scoped VMEM limit from the explicit per-step footprint."""
    try:
        cap = int(pltpu.get_tpu_info().vmem_capacity_bytes)
    except Exception:
        cap = 64 << 20                       # safe physical minimum (v7x)
    want = max(32 << 20, 2 * int(working_set_bytes))
    return int(min(want, (cap * 7) // 8))


# ------------------------------ Pallas kernel ------------------------------ #

def _temporal_block_kernel(*refs, shifts, s_pad, tl, cin, cout, has_down, nt):
    """Fused TemporalBlock on one (TL, C) time tile:
       relu(conv2(relu(conv1(x))) + residual(x))."""
    if has_down:
        (x_ref, w1_ref, b1_ref, w2_ref, b2_ref, wd_ref, bd_ref, o_ref,
         xh, hh) = refs
    else:
        (x_ref, w1_ref, b1_ref, w2_ref, b2_ref, o_ref, xh, hh) = refs
        wd_ref = bd_ref = None

    t = pl.program_id(1)
    x = x_ref[0]                                            # (tl, cin) bf16

    if s_pad > 0:
        # Causal zero halo at the start of every batch's time loop.  The halo
        # rows persist across tiles (scratch is persistent), so this runs only
        # when t == 0; later tiles get the halo from the carry update below.
        @pl.when(t == 0)
        def _zero_halo():
            xh[0:s_pad, :] = jnp.zeros((s_pad, cin), xh.dtype)
            hh[0:s_pad, :] = jnp.zeros((s_pad, cout), hh.dtype)

        xh[s_pad:s_pad + tl, :] = x                         # stage tile below halo

    # ---- conv1 (causal dilated): K accumulated MXU dots, no im2col ----------
    acc1 = None
    for j, s in enumerate(shifts):                          # tap j uses x[t - s]
        slab = x if s == 0 else xh[(s_pad - s):(s_pad - s + tl), :]
        d = jnp.dot(slab, w1_ref[j], preferred_element_type=jnp.float32)
        acc1 = d if acc1 is None else acc1 + d
    h1 = jnp.maximum(acc1 + b1_ref[...], 0.0)               # chomp1+relu1 (dropout1=id)
    h1b = h1.astype(hh.dtype)

    # ---- conv2 (causal dilated); h1 never leaves VMEM ------------------------
    if s_pad > 0:
        hh[s_pad:s_pad + tl, :] = h1b
    acc2 = None
    for j, s in enumerate(shifts):
        slab = h1b if s == 0 else hh[(s_pad - s):(s_pad - s + tl), :]
        d = jnp.dot(slab, w2_ref[j], preferred_element_type=jnp.float32)
        acc2 = d if acc2 is None else acc2 + d
    h2 = jnp.maximum(acc2 + b2_ref[...], 0.0)               # chomp2+relu2 (dropout2=id)

    # ---- residual (identity or fused 1x1 downsample) + final ReLU ------------
    if has_down:
        res = jnp.dot(x, wd_ref[...], preferred_element_type=jnp.float32) + bd_ref[...]
    else:
        res = x.astype(jnp.float32)
    o_ref[0] = jnp.maximum(h2 + res, 0.0).astype(o_ref.dtype)

    # ---- carry the last s_pad rows into the halo for the next time tile ------
    if s_pad > 0 and nt > 1:
        @pl.when(t + 1 < nt)
        def _carry():
            xh[0:s_pad, :] = x[tl - s_pad:, :]
            hh[0:s_pad, :] = h1b[tl - s_pad:, :]


# ----------------------------- pallas_call glue ----------------------------- #

def temporal_block_pallas(x, w1, b1, w2, b2, wd, bd, *, kernel_size, dilation,
                          time_tile):
    """x: (N, Lp, Cin_p) bf16.  Weights already channel-padded:
       w1 (K, Cin_p, Cout_p) bf16, b1 (1, Cout_p) f32, etc."""
    N, lp, cin = x.shape
    K = kernel_size
    cout = w1.shape[-1]
    shifts = tuple(dilation * (K - 1 - j) for j in range(K))
    S = max(shifts)
    s_pad = _round_up(S, 16) if S > 0 else 0
    tl = time_tile
    assert lp % tl == 0, (lp, tl)
    nt = lp // tl
    if nt > 1:
        assert s_pad <= tl, (s_pad, tl)      # carry must fit in one tile
    has_down = wd is not None
    dt = x.dtype
    bpe = jnp.dtype(dt).itemsize

    kern = functools.partial(_temporal_block_kernel, shifts=shifts, s_pad=s_pad,
                             tl=tl, cin=cin, cout=cout, has_down=has_down, nt=nt)

    inputs = [x, w1, b1, w2, b2]
    in_specs = [
        pl.BlockSpec((1, tl, cin), lambda b, t: (b, t, 0)),
        pl.BlockSpec((K, cin, cout), lambda b, t: (0, 0, 0)),
        pl.BlockSpec((1, cout), lambda b, t: (0, 0)),
        pl.BlockSpec((K, cout, cout), lambda b, t: (0, 0, 0)),
        pl.BlockSpec((1, cout), lambda b, t: (0, 0)),
    ]
    if has_down:
        inputs += [wd, bd]
        in_specs += [pl.BlockSpec((cin, cout), lambda b, t: (0, 0)),
                     pl.BlockSpec((1, cout), lambda b, t: (0, 0))]

    # Explicit per-step VMEM working set: halo scratch + double-buffered
    # activation blocks + (double-buffered) grid-invariant weights/biases.
    scratch_bytes = (s_pad + tl) * (cin + cout) * bpe
    act_bytes = 2 * tl * (cin + cout) * bpe
    w_bytes = 2 * (K * cin * cout + K * cout * cout
                   + (cin * cout if has_down else 0)) * bpe
    b_bytes = 2 * (3 if has_down else 2) * cout * 4
    working_set = scratch_bytes + act_bytes + w_bytes + b_bytes

    flops = 2 * N * lp * (K * cin * cout + K * cout * cout
                          + (cin * cout if has_down else 0))
    bytes_accessed = int(sum(int(a.size) * a.dtype.itemsize for a in inputs)
                         + N * lp * cout * bpe)

    return pl.pallas_call(
        kern,
        out_shape=jax.ShapeDtypeStruct((N, lp, cout), dt),
        grid_spec=pltpu.PrefetchScalarGridSpec(
            num_scalar_prefetch=0,
            grid=(N, nt),                     # batch parallel, time sequential
            in_specs=in_specs,
            out_specs=pl.BlockSpec((1, tl, cout), lambda b, t: (b, t, 0)),
            scratch_shapes=[
                pltpu.VMEM((s_pad + tl, cin), dt),   # x tile with carried halo
                pltpu.VMEM((s_pad + tl, cout), dt),  # h1 tile with carried halo
            ],
        ),
        compiler_params=pltpu.CompilerParams(
            dimension_semantics=("parallel", "arbitrary"),
            vmem_limit_bytes=_vmem_limit_bytes(working_set),
        ),
        cost_estimate=pl.CostEstimate(flops=flops, transcendentals=0,
                                      bytes_accessed=bytes_accessed),
    )(*inputs)


# ------------------------------- model glue --------------------------------- #

def _prep_conv(w_kio, b, cin_p, cout_p, dtype):
    """Zero-pad channels to (cin_p, cout_p); weights bf16, bias stays f32."""
    K, cin, cout = w_kio.shape
    w = jnp.zeros((K, cin_p, cout_p), jnp.float32).at[:, :cin, :cout].set(w_kio)
    bp = jnp.zeros((1, cout_p), jnp.float32).at[0, :cout].set(jnp.reshape(b, (-1,)))
    return w.astype(dtype), bp


def prepare_params(params, kernel_size, compute_dtype=jnp.bfloat16):
    """One-time weight padding/reshaping (hoisted out of the forward path)."""
    del kernel_size  # taps kept as a leading axis; nothing K-specific here
    prepared = []
    for dilation, (w1, b1, w2, b2, wd, bd) in params:
        cin = w1.shape[1]
        cout = w1.shape[-1]
        cin_p = _round_up(cin, 128)
        cout_p = _round_up(cout, 128)
        w1c, b1p = _prep_conv(w1, b1, cin_p, cout_p, compute_dtype)
        w2c, b2p = _prep_conv(w2, b2, cout_p, cout_p, compute_dtype)
        if wd is not None:
            wdc, bdp = _prep_conv(wd, bd, cin_p, cout_p, compute_dtype)
            wdc = wdc[0]                       # (cin_p, cout_p)
        else:
            assert cin_p == cout_p, "identity residual requires matching channels"
            wdc, bdp = None, None
        prepared.append(dict(dilation=dilation, cout=cout,
                             w1=w1c, b1=b1p, w2=w2c, b2=b2p, wd=wdc, bd=bdp))
    return prepared


def tcn_forward(x_ncl, prepared, kernel_size, *, time_tile=512,
                compute_dtype=jnp.bfloat16):
    """x_ncl: (N, C, L) like PyTorch.  Returns (N, C_last, L) float32."""
    N, C, L = x_ncl.shape
    K = kernel_size
    s_pad_max = max((_round_up(p["dilation"] * (K - 1), 16) if K > 1 else 0)
                    for p in prepared)

    tl = _round_up(max(16, min(time_tile, L)), 16)
    if tl < L:                                   # multi-tile: tile covers halo
        tl = max(tl, s_pad_max)
    lp = _round_up(L, tl)

    cp = _round_up(C, 128)
    h = jnp.transpose(x_ncl, (0, 2, 1))                     # -> (N, L, C)
    h = jnp.pad(h, ((0, 0), (0, lp - L), (0, cp - C))).astype(compute_dtype)
    for p in prepared:
        h = temporal_block_pallas(h, p["w1"], p["b1"], p["w2"], p["b2"],
                                  p["wd"], p["bd"],
                                  kernel_size=K, dilation=p["dilation"],
                                  time_tile=tl)
    c_last = prepared[-1]["cout"]
    y = h[:, :L, :c_last].astype(jnp.float32)
    return jnp.transpose(y, (0, 2, 1))                      # -> (N, C_last, L)


# ---------------------------- pure-JAX reference ----------------------------- #

def _causal_conv_ref(x_ncl, w_kio, b, d):
    K = w_kio.shape[0]
    w_oih = jnp.transpose(w_kio, (2, 1, 0))                 # (Cout, Cin, K)
    pad = d * (K - 1)
    y = jax.lax.conv_general_dilated(
        x_ncl, w_oih, window_strides=(1,), padding=[(pad, 0)],
        rhs_dilation=(d,), dimension_numbers=("NCH", "OIH", "NCH"))
    return y + b.reshape(1, -1, 1)


def tcn_ref(x_ncl, params, kernel_size):
    h = x_ncl
    for dilation, (w1, b1, w2, b2, wd, bd) in params:
        h1 = jax.nn.relu(_causal_conv_ref(h, w1, b1, dilation))
        h2 = jax.nn.relu(_causal_conv_ref(h1, w2, b2, dilation))
        res = h if wd is None else _causal_conv_ref(h, wd, bd, 1)
        h = jax.nn.relu(h2 + res)
    return h


# ---------------------------------- params ----------------------------------- #

def init_conv(key, cin, cout, K):
    """PyTorch Conv1d default init; weights stored as (K, Cin, Cout), bias (1, Cout)."""
    k1, k2 = jax.random.split(key)
    bound = 1.0 / math.sqrt(cin * K)
    w = jax.random.uniform(k1, (cout, cin, K), jnp.float32, -bound, bound)
    b = jax.random.uniform(k2, (cout,), jnp.float32, -bound, bound)
    return jnp.transpose(w, (2, 1, 0)), b.reshape(1, cout)


# TODO(synk): nn.Dropout is a no-op here (inference mode); training-mode dropout
# is not implemented.

if __name__ == "__main__":
    num_inputs = 4
    num_channels = (8, 16, 16)    # last block exercises the identity residual
    kernel_size = 2
    N, L = 2, 64

    key = jax.random.PRNGKey(0)
    key, xk = jax.random.split(key)
    x = jax.random.normal(xk, (N, num_inputs, L), jnp.float32)  # PyTorch NCL input

    params = []
    in_ch = num_inputs
    for i, out_ch in enumerate(num_channels):
        dilation = 2 ** i
        key, k1, k2, k3 = jax.random.split(key, 4)
        w1, b1 = init_conv(k1, in_ch, out_ch, kernel_size)
        w2, b2 = init_conv(k2, out_ch, out_ch, kernel_size)
        if in_ch != out_ch:
            wd, bd = init_conv(k3, in_ch, out_ch, 1)
        else:
            wd, bd = None, None
        params.append((dilation, (w1, b1, w2, b2, wd, bd)))
        in_ch = out_ch

    prepared = prepare_params(params, kernel_size)          # one-time weight prep
    # time_tile=32 forces multiple time tiles so the carried-halo path is tested.
    y = tcn_forward(x, prepared, kernel_size, time_tile=32)
    y = jax.block_until_ready(y)

    # f32 reference evaluated on bf16-rounded inputs/weights (kernel computes in
    # bf16 with f32 accumulation and bf16 inter-block activations), so tolerances
    # cover only the in-kernel intermediate casts across the 3-block stack.
    def _q(a):
        return a.astype(jnp.bfloat16).astype(jnp.float32)

    params_q = [(d, (_q(w1), b1, _q(w2), b2, None if wd is None else _q(wd), bd))
                for d, (w1, b1, w2, b2, wd, bd) in params]
    y_ref = tcn_ref(_q(x), params_q, kernel_size)

    assert y.shape == (N, num_channels[-1], L), y.shape
    max_err = float(jnp.max(jnp.abs(y - y_ref)))
    assert jnp.allclose(y, y_ref, atol=5e-2, rtol=5e-2), max_err

    print("KERNEL_OK")
</pallas_src>

<mosaic_0001>
module attributes {stable_mosaic.version = 11 : i64} {
  func.func @_temporal_block_kernel(%arg0: i32, %arg1: i32, %arg2: memref<1x32x128xbf16, #tpu.memory_space<vmem>>, %arg3: memref<2x128x128xbf16, #tpu.memory_space<vmem>>, %arg4: memref<1x128xf32, #tpu.memory_space<vmem>>, %arg5: memref<2x128x128xbf16, #tpu.memory_space<vmem>>, %arg6: memref<1x128xf32, #tpu.memory_space<vmem>>, %arg7: memref<128x128xbf16, #tpu.memory_space<vmem>>, %arg8: memref<1x128xf32, #tpu.memory_space<vmem>>, %arg9: memref<1x32x128xbf16, #tpu.memory_space<vmem>>, %arg10: memref<48x128xbf16, #tpu.memory_space<vmem>>, %arg11: memref<48x128xbf16, #tpu.memory_space<vmem>>) attributes {dimension_semantics = [#tpu.dimension_semantics<parallel>, #tpu.dimension_semantics<arbitrary>], iteration_bounds = array<i64: 2, 2>, scalar_prefetch = 0 : i64, scratch_operands = 2 : i64, tpu.core_type = #tpu.core_type<tc>, window_params = [{transform_indices = @transform_0, window_bounds = array<i64: 1, 32, 128>}, {pipeline_mode = #tpu.pipeline_mode<synchronous>, transform_indices = @transform_1, window_bounds = array<i64: 2, 128, 128>}, {pipeline_mode = #tpu.pipeline_mode<synchronous>, transform_indices = @transform_2, window_bounds = array<i64: 1, 128>}, {pipeline_mode = #tpu.pipeline_mode<synchronous>, transform_indices = @transform_3, window_bounds = array<i64: 2, 128, 128>}, {pipeline_mode = #tpu.pipeline_mode<synchronous>, transform_indices = @transform_4, window_bounds = array<i64: 1, 128>}, {pipeline_mode = #tpu.pipeline_mode<synchronous>, transform_indices = @transform_5, window_bounds = array<i64: 128, 128>}, {pipeline_mode = #tpu.pipeline_mode<synchronous>, transform_indices = @transform_6, window_bounds = array<i64: 1, 128>}, {transform_indices = @transform_7, window_bounds = array<i64: 1, 32, 128>}]} {
    %c0 = arith.constant 0 : index
    %c0_0 = arith.constant 0 : index
    %c0_1 = arith.constant 0 : index
    %0 = vector.load %arg2[%c0, %c0_0, %c0_1] : memref<1x32x128xbf16, #tpu.memory_space<vmem>>, vector<1x32x128xbf16>
    %1 = vector.shape_cast %0 : vector<1x32x128xbf16> to vector<32x128xbf16>
    %c0_i32 = arith.constant 0 : i32
    %2 = arith.cmpi eq, %arg1, %c0_i32 : i32
    %3 = arith.extui %2 : i1 to i32
    %c0_i32_2 = arith.constant 0 : i32
    %4 = arith.cmpi ne, %3, %c0_i32_2 : i32
    scf.if %4 {
      %cst_39 = arith.constant 0.000000e+00 : bf16
      %50 = vector.broadcast %cst_39 : bf16 to vector<16x128xbf16>
      %c0_40 = arith.constant 0 : index
      %c0_41 = arith.constant 0 : index
      %51 = vector.load %arg10[%c0_40, %c0_41] : memref<48x128xbf16, #tpu.memory_space<vmem>>, vector<16x128xbf16>
      tpu.vector_store %arg10[%c0_40, %c0_41], %50 {strides = array<i32>} : memref<48x128xbf16, #tpu.memory_space<vmem>>, vector<16x128xbf16>,
      %cst_42 = arith.constant 0.000000e+00 : bf16
      %52 = vector.broadcast %cst_42 : bf16 to vector<16x128xbf16>
      %c0_43 = arith.constant 0 : index
      %c0_44 = arith.constant 0 : index
      %53 = vector.load %arg11[%c0_43, %c0_44] : memref<48x128xbf16, #tpu.memory_space<vmem>>, vector<16x128xbf16>
      tpu.vector_store %arg11[%c0_43, %c0_44], %52 {strides = array<i32>} : memref<48x128xbf16, #tpu.memory_space<vmem>>, vector<16x128xbf16>,
    } else {
    }
    %c16 = arith.constant 16 : index
    %c0_3 = arith.constant 0 : index
    %5 = vector.load %arg10[%c16, %c0_3] : memref<48x128xbf16, #tpu.memory_space<vmem>>, vector<32x128xbf16>
    tpu.vector_store %arg10[%c16, %c0_3], %1 {strides = array<i32>} : memref<48x128xbf16, #tpu.memory_space<vmem>>, vector<32x128xbf16>,
    %c15 = arith.constant 15 : index
    %c0_4 = arith.constant 0 : index
    %6 = vector.load %arg10[%c15, %c0_4] : memref<48x128xbf16, #tpu.memory_space<vmem>>, vector<32x128xbf16>
    %c0_5 = arith.constant 0 : index
    %c0_6 = arith.constant 0 : index
    %c0_7 = arith.constant 0 : index
    %7 = vector.load %arg3[%c0_5, %c0_6, %c0_7] : memref<2x128x128xbf16, #tpu.memory_space<vmem>>, vector<1x128x128xbf16>
    %8 = vector.shape_cast %7 : vector<1x128x128xbf16> to vector<128x128xbf16>
    %cst = arith.constant dense<0.000000e+00> : vector<32x128xf32>
    %9 = tpu.matmul %6, %8, %cst {dimension_numbers = #tpu.dot_dimension_numbers<[1], [0], [0], [1], [0, 0, 1, 1], [], []>} : vector<32x128xbf16>, vector<128x128xbf16>, vector<32x128xf32> -> vector<32x128xf32>
    %c1 = arith.constant 1 : index
    %c0_8 = arith.constant 0 : index
    %c0_9 = arith.constant 0 : index
    %10 = vector.load %arg3[%c1, %c0_8, %c0_9] : memref<2x128x128xbf16, #tpu.memory_space<vmem>>, vector<1x128x128xbf16>
    %11 = vector.shape_cast %10 : vector<1x128x128xbf16> to vector<128x128xbf16>
    %cst_10 = arith.constant dense<0.000000e+00> : vector<32x128xf32>
    %12 = tpu.matmul %1, %11, %cst_10 {dimension_numbers = #tpu.dot_dimension_numbers<[1], [0], [0], [1], [0, 0, 1, 1], [], []>} : vector<32x128xbf16>, vector<128x128xbf16>, vector<32x128xf32> -> vector<32x128xf32>
    %13 = arith.addf %9, %12 : vector<32x128xf32>
    %c0_11 = arith.constant 0 : index
    %c0_12 = arith.constant 0 : index
    %14 = vector.load %arg4[%c0_11, %c0_12] : memref<1x128xf32, #tpu.memory_space<vmem>>, vector<1x128xf32>
    %15 = vector.broadcast %14 : vector<1x128xf32> to vector<32x128xf32>
    %16 = arith.addf %13, %15 : vector<32x128xf32>
    %cst_13 = arith.constant 0.000000e+00 : f32
    %17 = vector.broadcast %cst_13 : f32 to vector<32x128xf32>
    %18 = arith.maximumf %16, %17 : vector<32x128xf32>
    %19 = arith.truncf %18 : vector<32x128xf32> to vector<32x128xbf16>
    %c16_14 = arith.constant 16 : index
    %c0_15 = arith.constant 0 : index
    %20 = vector.load %arg11[%c16_14, %c0_15] : memref<48x128xbf16, #tpu.memory_space<vmem>>, vector<32x128xbf16>
    tpu.vector_store %arg11[%c16_14, %c0_15], %19 {strides = array<i32>} : memref<48x128xbf16, #tpu.memory_space<vmem>>, vector<32x128xbf16>,
    %c15_16 = arith.constant 15 : index
    %c0_17 = arith.constant 0 : index
    %21 = vector.load %arg11[%c15_16, %c0_17] : memref<48x128xbf16, #tpu.memory_space<vmem>>, vector<32x128xbf16>
    %c0_18 = arith.constant 0 : index
    %c0_19 = arith.constant 0 : index
    %c0_20 = arith.constant 0 : index
    %22 = vector.load %arg5[%c0_18, %c0_19, %c0_20] : memref<2x128x128xbf16, #tpu.memory_space<vmem>>, vector<1x128x128xbf16>
    %23 = vector.shape_cast %22 : vector<1x128x128xbf16> to vector<128x128xbf16>
    %cst_21 = arith.constant dense<0.000000e+00> : vector<32x128xf32>
    %24 = tpu.matmul %21, %23, %cst_21 {dimension_numbers = #tpu.dot_dimension_numbers<[1], [0], [0], [1], [0, 0, 1, 1], [], []>} : vector<32x128xbf16>, vector<128x128xbf16>, vector<32x128xf32> -> vector<32x128xf32>
    %c1_22 = arith.constant 1 : index
    %c0_23 = arith.constant 0 : index
    %c0_24 = arith.constant 0 : index
    %25 = vector.load %arg5[%c1_22, %c0_23, %c0_24] : memref<2x128x128xbf16, #tpu.memory_space<vmem>>, vector<1x128x128xbf16>
    %26 = vector.shape_cast %25 : vector<1x128x128xbf16> to vector<128x128xbf16>
    %cst_25 = arith.constant dense<0.000000e+00> : vector<32x128xf32>
    %27 = tpu.matmul %19, %26, %cst_25 {dimension_numbers = #tpu.dot_dimension_numbers<[1], [0], [0], [1], [0, 0, 1, 1], [], []>} : vector<32x128xbf16>, vector<128x128xbf16>, vector<32x128xf32> -> vector<32x128xf32>
    %28 = arith.addf %24, %27 : vector<32x128xf32>
    %c0_26 = arith.constant 0 : index
    %c0_27 = arith.constant 0 : index
    %29 = vector.load %arg6[%c0_26, %c0_27] : memref<1x128xf32, #tpu.memory_space<vmem>>, vector<1x128xf32>
    %30 = vector.broadcast %29 : vector<1x128xf32> to vector<32x128xf32>
    %31 = arith.addf %28, %30 : vector<32x128xf32>
    %cst_28 = arith.constant 0.000000e+00 : f32
    %32 = vector.broadcast %cst_28 : f32 to vector<32x128xf32>
    %33 = arith.maximumf %31, %32 : vector<32x128xf32>
    %c0_29 = arith.constant 0 : index
    %c0_30 = arith.constant 0 : index
    %34 = vector.load %arg7[%c0_29, %c0_30] : memref<128x128xbf16, #tpu.memory_space<vmem>>, vector<128x128xbf16>
    %cst_31 = arith.constant dense<0.000000e+00> : vector<32x128xf32>
    %35 = tpu.matmul %1, %34, %cst_31 {dimension_numbers = #tpu.dot_dimension_numbers<[1], [0], [0], [1], [0, 0, 1, 1], [], []>} : vector<32x128xbf16>, vector<128x128xbf16>, vector<32x128xf32> -> vector<32x128xf32>
    %c0_32 = arith.constant 0 : index
    %c0_33 = arith.constant 0 : index
    %36 = vector.load %arg8[%c0_32, %c0_33] : memref<1x128xf32, #tpu.memory_space<vmem>>, vector<1x128xf32>
    %37 = vector.broadcast %36 : vector<1x128xf32> to vector<32x128xf32>
    %38 = arith.addf %35, %37 : vector<32x128xf32>
    %39 = arith.addf %33, %38 : vector<32x128xf32>
    %cst_34 = arith.constant 0.000000e+00 : f32
    %40 = vector.broadcast %cst_34 : f32 to vector<32x128xf32>
    %41 = arith.maximumf %39, %40 : vector<32x128xf32>
    %42 = arith.truncf %41 : vector<32x128xf32> to vector<32x128xbf16>
    %c0_35 = arith.constant 0 : index
    %c0_36 = arith.constant 0 : index
    %c0_37 = arith.constant 0 : index
    %43 = vector.load %arg9[%c0_35, %c0_36, %c0_37] : memref<1x32x128xbf16, #tpu.memory_space<vmem>>, vector<1x32x128xbf16>
    %44 = vector.shape_cast %43 : vector<1x32x128xbf16> to vector<32x128xbf16>
    %45 = vector.shape_cast %42 : vector<32x128xbf16> to vector<1x32x128xbf16>
    tpu.vector_store %arg9[%c0_35, %c0_36, %c0_37], %45 {strides = array<i32>} : memref<1x32x128xbf16, #tpu.memory_space<vmem>>, vector<1x32x128xbf16>,
    %c1_i32 = arith.constant 1 : i32
    %46 = arith.addi %arg1, %c1_i32 : i32
    %c2_i32 = arith.constant 2 : i32
    %47 = arith.cmpi slt, %46, %c2_i32 : i32
    %48 = arith.extui %47 : i1 to i32
    %c0_i32_38 = arith.constant 0 : i32
    %49 = arith.cmpi ne, %48, %c0_i32_38 : i32
    scf.if %49 {
      %50 = vector.extract_strided_slice %1 {offsets = [16, 0], sizes = [16, 128], strides = [1, 1]} : vector<32x128xbf16> to vector<16x128xbf16>
      %c0_39 = arith.constant 0 : index
      %c0_40 = arith.constant 0 : index
      %51 = vector.load %arg10[%c0_39, %c0_40] : memref<48x128xbf16, #tpu.memory_space<vmem>>, vector<16x128xbf16>
      tpu.vector_store %arg10[%c0_39, %c0_40], %50 {strides = array<i32>} : memref<48x128xbf16, #tpu.memory_space<vmem>>, vector<16x128xbf16>,
      %52 = vector.extract_strided_slice %19 {offsets = [16, 0], sizes = [16, 128], strides = [1, 1]} : vector<32x128xbf16> to vector<16x128xbf16>
      %c0_41 = arith.constant 0 : index
      %c0_42 = arith.constant 0 : index
      %53 = vector.load %arg11[%c0_41, %c0_42] : memref<48x128xbf16, #tpu.memory_space<vmem>>, vector<16x128xbf16>
      tpu.vector_store %arg11[%c0_41, %c0_42], %52 {strides = array<i32>} : memref<48x128xbf16, #tpu.memory_space<vmem>>, vector<16x128xbf16>,
    } else {
    }
    return
  }
  func.func @transform_0(%arg0: i32, %arg1: i32) -> (i32, i32, i32) {
    %c0_i32 = arith.constant 0 : i32
    %c0_i32_0 = arith.constant 0 : i32
    return %arg0, %arg1, %c0_i32 : i32, i32, i32
  }
  func.func @transform_1(%arg0: i32, %arg1: i32) -> (i32, i32, i32) {
    %c0_i32 = arith.constant 0 : i32
    %c0_i32_0 = arith.constant 0 : i32
    %c0_i32_1 = arith.constant 0 : i32
    %c0_i32_2 = arith.constant 0 : i32
    return %c0_i32, %c0_i32_0, %c0_i32_1 : i32, i32, i32
  }
  func.func @transform_2(%arg0: i32, %arg1: i32) -> (i32, i32) {
    %c0_i32 = arith.constant 0 : i32
    %c0_i32_0 = arith.constant 0 : i32
    %c0_i32_1 = arith.constant 0 : i32
    return %c0_i32, %c0_i32_0 : i32, i32
  }
  func.func @transform_3(%arg0: i32, %arg1: i32) -> (i32, i32, i32) {
    %c0_i32 = arith.constant 0 : i32
    %c0_i32_0 = arith.constant 0 : i32
    %c0_i32_1 = arith.constant 0 : i32
    %c0_i32_2 = arith.constant 0 : i32
    return %c0_i32, %c0_i32_0, %c0_i32_1 : i32, i32, i32
  }
  func.func @transform_4(%arg0: i32, %arg1: i32) -> (i32, i32) {
    %c0_i32 = arith.constant 0 : i32
    %c0_i32_0 = arith.constant 0 : i32
    %c0_i32_1 = arith.constant 0 : i32
    return %c0_i32, %c0_i32_0 : i32, i32
  }
  func.func @transform_5(%arg0: i32, %arg1: i32) -> (i32, i32) {
    %c0_i32 = arith.constant 0 : i32
    %c0_i32_0 = arith.constant 0 : i32
    %c0_i32_1 = arith.constant 0 : i32
    return %c0_i32, %c0_i32_0 : i32, i32
  }
  func.func @transform_6(%arg0: i32, %arg1: i32) -> (i32, i32) {
    %c0_i32 = arith.constant 0 : i32
    %c0_i32_0 = arith.constant 0 : i32
    %c0_i32_1 = arith.constant 0 : i32
    return %c0_i32, %c0_i32_0 : i32, i32
  }
  func.func @transform_7(%arg0: i32, %arg1: i32) -> (i32, i32, i32) {
    %c0_i32 = arith.constant 0 : i32
    %c0_i32_0 = arith.constant 0 : i32
    return %arg0, %arg1, %c0_i32 : i32, i32, i32
  }
}

</mosaic_0001>

<llo_original>
// kernel: tpu_custom_call.1
$region0: #{tpu_custom_call.1}
  #allocation0 [shape = 'u32[]', space=smem, size = 0x4, offset = 0x4, fixed_abs, tag = 'smem constant byte address 0x4 - core index']
  #allocation1 [shape = 'u32[144,128]{1,0:T(1,128)}', space=vmem, size = 0x12000, scoped, tag = 'internal scratch']
  #allocation2 [shape = 'bf16[48,128]{1,0:T(16,128)(2,1)}', space=vmem, size = 0x3000, scoped, tag = 'scratch operand']
  #allocation3 [shape = 'bf16[48,128]{1,0:T(16,128)(2,1)}', space=vmem, size = 0x3000, scoped, tag = 'scratch operand']
  %s0 = inlined_call_operand.hbm [shape: bf16[2,64,128], index: 0, kind: input, shape index: {}]
  %s1 = inlined_call_operand.hbm [shape: bf16[2,128,128], index: 1, kind: input, shape index: {}]
  %s2 = inlined_call_operand.vmem [shape: f32[1,128], index: 2, kind: input, shape index: {}]
  %s3 = inlined_call_operand.hbm [shape: bf16[2,128,128], index: 3, kind: input, shape index: {}]
  %s4 = inlined_call_operand.vmem [shape: f32[1,128], index: 4, kind: input, shape index: {}]
  %s5 = inlined_call_operand.hbm [shape: bf16[128,128], index: 5, kind: input, shape index: {}]
  %s6 = inlined_call_operand.vmem [shape: f32[1,128], index: 6, kind: input, shape index: {}]
  %s7 = inlined_call_operand.hbm [shape: bf16[2,64,128], index: 7, kind: output, shape index: {}]
  %s8 = sld [smem:[#allocation0]]
  $region85: #{tpu_custom_call.1} parent=0
    _
  %s10 = ssub.s32 1, %s8
  %s11 = scalar_select 0, %s10, %s8
  $region1: #{tpu_custom_call.1} parent=0
    #allocation4 [shape = 'u8[16384]{0}', space=vmem, size = 0x4000, scoped, tag = 'input window, operand 0']
    #allocation5 [shape = 's32[2]{0}', space=sflag, size = 0x8, scoped, tag = 'scoped memory for tpu_custom_call.1']
    #allocation6 [shape = 's32[2]{0}', space=sflag, size = 0x8, scoped, tag = 'scoped memory for tpu_custom_call.1']
    #allocation7 [shape = 'u8[65536]{0}', space=vmem, size = 0x10000, scoped, tag = 'input window, operand 1, single buffered']
    #allocation8 [shape = 's32[1]{0}', space=sflag, size = 0x4, scoped, tag = 'scoped memory for tpu_custom_call.1']
    #allocation9 [shape = 'u8[65536]{0}', space=vmem, size = 0x10000, scoped, tag = 'input window, operand 3, single buffered']
    #allocation10 [shape = 'u8[32768]{0}', space=vmem, size = 0x8000, scoped, tag = 'input window, operand 5, single buffered']
    #allocation11 [shape = 's32[1]{0}', space=sflag, size = 0x4, scoped, tag = 'scoped memory for tpu_custom_call.1']
    #allocation12 [shape = 'u8[16384]{0}', space=vmem, size = 0x4000, scoped, tag = 'output window, operand 0']
    %12 = vsyncpa [#allocation5], 0
    %s13 = scalar_lea.sflag [#allocation5], 1
    %14 = vsyncpa %s13, 0
    %15 = vsyncpa [#allocation8], 0
    %16 = vsyncpa [#allocation11], 0
    %17 = vsyncpa [#allocation6], 0
    %s18 = scalar_lea.sflag [#allocation6], 1
    %19 = vsyncpa %s18, 0
    loop: start=0, step=1, limit=6
    $region2: #{tpu_custom_call.1} parent=1 // loop_pre_header
      _
    $region3: #{tpu_custom_call.1} parent=1 // loop_header
      %s21 = sphi 0, %s25
      %p22 = scmp.ge.s32.totalorder %s21, 6
      %s28 = sphi 0, %s40
      %s29 = sphi 0, %s36
      %s30 = sphi 0, %s28
      %s31 = sphi 0, %s29
      %s32 = sphi 0, %s30
      %s33 = sphi 0, %s31
      %s45 = sphi 0, %s47
      %s48 = sphi 0, %s45
      %s49 = sphi 0, %s48
      %s65 = sphi 0, %s49
      %s69 = sphi 0, %s69
      %s71 = sphi 0, %s69
      %s72 = sphi 0, %s71
      %s86 = sphi 0, %s72
      %s90 = sphi 0, %s90
      %s92 = sphi 0, %s90
      %s93 = sphi 0, %s92
      %s107 = sphi 0, %s93
      %s111 = sphi 0, %s111
      %s113 = sphi 0, %s111
      %s114 = sphi 0, %s113
      %s128 = sphi 0, %s114
      %s132 = sphi 0, %s132
      %s134 = sphi 0, %s132
      %s135 = sphi 0, %s134
      %s149 = sphi 0, %s135
      %s153 = sphi 0, %s153
      %s155 = sphi 0, %s153
      %s156 = sphi 0, %s155
      %s170 = sphi 0, %s156
      %s174 = sphi 0, %s174
      %s176 = sphi 0, %s174
      %s177 = sphi 0, %s176
      %s191 = sphi 0, %s177
      %s199 = sphi 0, %s201
      %s202 = sphi 0, %s199
      %s203 = sphi 0, %s202
      %s219 = sphi 0, %s203
    $region4: #{tpu_custom_call.1} parent=1 // loop_header_branch
      %24 = sbr.rel (%p22) target = $region8
    $region5: #{tpu_custom_call.1} parent=1 // loop_body
      %s26 = ssub.s32 %s21, 1
      %s27 = ssub.s32 %s21, 2
      %s34 = sadd.s32 1, %s29
      %p35 = scmp.ge.s32.totalorder %s34, 2
      %s36 = scalar_select %p35, 0, %s34
      %s37 = sadd.s32 1, %s28
      %s38 = scalar_select %p35, %s37, %s28
      %p39 = scmp.ge.s32.totalorder %s38, 2
      %s40 = scalar_select %p39, 0, %s38
      %s41 = ssub.s32 %s28, %s40
      %s42 = ssub.s32 %s29, %s36
      %s43 = sor.u32 %s41, %s42
      %p44 = scmp.eq.s32.totalorder %s43, 0
      %s46 = sadd.s32 %s45, 1
      %s47 = scalar_select %p44, %s45, %s46
      %p50 = pneg %p44
      %p51 = scmp.eq.s32.totalorder %s21, 3
      %p52 = por %p50, %p51
      %p53 = scmp.ne.s32.totalorder %s45, %s48
      %p54 = scmp.eq.s32.totalorder %s21, 0
      %p55 = por %p53, %p54
      %p56 = scmp.ne.s32.totalorder %s45, %s48
      %p57 = scmp.eq.s32.totalorder %s26, 3
      %p58 = por %p56, %p57
      %p59 = scmp.ne.s32.totalorder %s48, %s49
      %p60 = scmp.eq.s32.totalorder %s26, 0
      %p61 = por %p59, %p60
      %p62 = scmp.ne.s32.totalorder %s48, %s49
      %p63 = scmp.eq.s32.totalorder %s27, 3
      %p64 = por %p62, %p63
      %p66 = scmp.ne.s32.totalorder %s49, %s65
      %p67 = scmp.eq.s32.totalorder %s27, 0
      %p68 = por %p66, %p67
      %s70 = sadd.s32 %s69, 1
      %p73 = scmp.eq.s32.totalorder %s21, 3
      %p74 = scmp.ne.s32.totalorder %s69, %s71
      %p75 = scmp.eq.s32.totalorder %s21, 0
      %p76 = por %p74, %p75
      %p77 = scmp.ne.s32.totalorder %s69, %s71
      %p78 = scmp.eq.s32.totalorder %s26, 3
      %p79 = por %p77, %p78
      %p80 = scmp.ne.s32.totalorder %s71, %s72
      %p81 = scmp.eq.s32.totalorder %s26, 0
      %p82 = por %p80, %p81
      %p83 = scmp.ne.s32.totalorder %s71, %s72
      %p84 = scmp.eq.s32.totalorder %s27, 3
      %p85 = por %p83, %p84
      %p87 = scmp.ne.s32.totalorder %s72, %s86
      %p88 = scmp.eq.s32.totalorder %s27, 0
      %p89 = por %p87, %p88
      %s91 = sadd.s32 %s90, 1
      %p94 = scmp.eq.s32.totalorder %s21, 3
      %p95 = scmp.ne.s32.totalorder %s90, %s92
      %p96 = scmp.eq.s32.totalorder %s21, 0
      %p97 = por %p95, %p96
      %p98 = scmp.ne.s32.totalorder %s90, %s92
      %p99 = scmp.eq.s32.totalorder %s26, 3
      %p100 = por %p98, %p99
      %p101 = scmp.ne.s32.totalorder %s92, %s93
      %p102 = scmp.eq.s32.totalorder %s26, 0
      %p103 = por %p101, %p102
      %p104 = scmp.ne.s32.totalorder %s92, %s93
      %p105 = scmp.eq.s32.totalorder %s27, 3
      %p106 = por %p104, %p105
      %p108 = scmp.ne.s32.totalorder %s93, %s107
      %p109 = scmp.eq.s32.totalorder %s27, 0
      %p110 = por %p108, %p109
      %s112 = sadd.s32 %s111, 1
      %p115 = scmp.eq.s32.totalorder %s21, 3
      %p116 = scmp.ne.s32.totalorder %s111, %s113
      %p117 = scmp.eq.s32.totalorder %s21, 0
      %p118 = por %p116, %p117
      %p119 = scmp.ne.s32.totalorder %s111, %s113
      %p120 = scmp.eq.s32.totalorder %s26, 3
      %p121 = por %p119, %p120
      %p122 = scmp.ne.s32.totalorder %s113, %s114
      %p123 = scmp.eq.s32.totalorder %s26, 0
      %p124 = por %p122, %p123
      %p125 = scmp.ne.s32.totalorder %s113, %s114
      %p126 = scmp.eq.s32.totalorder %s27, 3
      %p127 = por %p125, %p126
      %p129 = scmp.ne.s32.totalorder %s114, %s128
      %p130 = scmp.eq.s32.totalorder %s27, 0
      %p131 = por %p129, %p130
      %s133 = sadd.s32 %s132, 1
      %p136 = scmp.eq.s32.totalorder %s21, 3
      %p137 = scmp.ne.s32.totalorder %s132, %s134
      %p138 = scmp.eq.s32.totalorder %s21, 0
      %p139 = por %p137, %p138
      %p140 = scmp.ne.s32.totalorder %s132, %s134
      %p141 = scmp.eq.s32.totalorder %s26, 3
      %p142 = por %p140, %p141
      %p143 = scmp.ne.s32.totalorder %s134, %s135
      %p144 = scmp.eq.s32.totalorder %s26, 0
      %p145 = por %p143, %p144
      %p146 = scmp.ne.s32.totalorder %s134, %s135
      %p147 = scmp.eq.s32.totalorder %s27, 3
      %p148 = por %p146, %p147
      %p150 = scmp.ne.s32.totalorder %s135, %s149
      %p151 = scmp.eq.s32.totalorder %s27, 0
      %p152 = por %p150, %p151
      %s154 = sadd.s32 %s153, 1
      %p157 = scmp.eq.s32.totalorder %s21, 3
      %p158 = scmp.ne.s32.totalorder %s153, %s155
      %p159 = scmp.eq.s32.totalorder %s21, 0
      %p160 = por %p158, %p159
      %p161 = scmp.ne.s32.totalorder %s153, %s155
      %p162 = scmp.eq.s32.totalorder %s26, 3
      %p163 = por %p161, %p162
      %p164 = scmp.ne.s32.totalorder %s155, %s156
      %p165 = scmp.eq.s32.totalorder %s26, 0
      %p166 = por %p164, %p165
      %p167 = scmp.ne.s32.totalorder %s155, %s156
      %p168 = scmp.eq.s32.totalorder %s27, 3
      %p169 = por %p167, %p168
      %p171 = scmp.ne.s32.totalorder %s156, %s170
      %p172 = scmp.eq.s32.totalorder %s27, 0
      %p173 = por %p171, %p172
      %s175 = sadd.s32 %s174, 1
      %p178 = scmp.eq.s32.totalorder %s21, 3
      %p179 = scmp.ne.s32.totalorder %s174, %s176
      %p180 = scmp.eq.s32.totalorder %s21, 0
      %p181 = por %p179, %p180
      %p182 = scmp.ne.s32.totalorder %s174, %s176
      %p183 = scmp.eq.s32.totalorder %s26, 3
      %p184 = por %p182, %p183
      %p185 = scmp.ne.s32.totalorder %s176, %s177
      %p186 = scmp.eq.s32.totalorder %s26, 0
      %p187 = por %p185, %p186
      %p188 = scmp.ne.s32.totalorder %s176, %s177
      %p189 = scmp.eq.s32.totalorder %s27, 3
      %p190 = por %p188, %p189
      %p192 = scmp.ne.s32.totalorder %s177, %s191
      %p193 = scmp.eq.s32.totalorder %s27, 0
      %p194 = por %p192, %p193
      %s195 = ssub.s32 %s28, %s40
      %s196 = ssub.s32 %s29, %s36
      %s197 = sor.u32 %s195, %s196
      %p198 = scmp.eq.s32.totalorder %s197, 0
      %s200 = sadd.s32 %s199, 1
      %s201 = scalar_select %p198, %s199, %s200
      %p204 = pneg %p198
      %p205 = scmp.eq.s32.totalorder %s21, 3
      %p206 = por %p204, %p205
      %p207 = scmp.ne.s32.totalorder %s199, %s202
      %p208 = scmp.eq.s32.totalorder %s21, 0
      %p209 = por %p207, %p208
      %p210 = scmp.ne.s32.totalorder %s199, %s202
      %p211 = scmp.eq.s32.totalorder %s26, 3
      %p212 = por %p210, %p211
      %p213 = scmp.ne.s32.totalorder %s202, %s203
      %p214 = scmp.eq.s32.totalorder %s26, 0
      %p215 = por %p213, %p214
      %p216 = scmp.ne.s32.totalorder %s202, %s203
      %p217 = scmp.eq.s32.totalorder %s27, 3
      %p218 = por %p216, %p217
      %p220 = scmp.ne.s32.totalorder %s203, %s219
      %p221 = scmp.eq.s32.totalorder %s27, 0
      %p222 = por %p220, %p221
      %p223 = scmp.le.s32.totalorder 1, %s21
      %p224 = scmp.lt.s32.totalorder %s21, 5
      %p225 = pnand %p223, %p224
      %p226 = pneg %p225
      // Predicated region
      $region9: #{tpu_custom_call.1} parent=5 // pred_check
        _
      $region10: #{tpu_custom_call.1} parent=5 // pred_check_branch
        %228 = sbr.rel (%p225) target = $region12
      $region11: #{tpu_custom_call.1} parent=5 // pred_region
        %s229 = ssub.s32 %s21, 1
        // Predicated region
        $region13: #{tpu_custom_call.1} parent=11 // pred_check
          %p230 = pneg %p82
        $region14: #{tpu_custom_call.1} parent=11 // pred_check_branch
          %232 = sbr.rel (%p230) target = $region16
        $region15: #{tpu_custom_call.1} parent=11 // pred_region
          %s234 = ssub.s32 2048, 2048
          %235 = vsyncadd [#allocation8], %s234
          %s236 = sshll.u32 [#allocation7], 4
          %s237 = int_to_ptr.vmem [resolvable:$true] %s236
          %242 = dma.hbm_to_vmem [thread:$0]  %s1, 2048, %s237, [#allocation8], 64, 64, 4
        $region16: #{tpu_custom_call.1} parent=11 // pred_fallthru
          _
        // Predicated region
        $region17: #{tpu_custom_call.1} parent=11 // pred_check
          %p243 = pneg %p103
        $region18: #{tpu_custom_call.1} parent=11 // pred_check_branch
          %245 = sbr.rel (%p243) target = $region20
        $region19: #{tpu_custom_call.1} parent=11 // pred_region
          _
        $region20: #{tpu_custom_call.1} parent=11 // pred_fallthru
          _
        // Predicated region
        $region21: #{tpu_custom_call.1} parent=11 // pred_check
          %p246 = pneg %p124
        $region22: #{tpu_custom_call.1} parent=11 // pred_check_branch
          %248 = sbr.rel (%p246) target = $region24
        $region23: #{tpu_custom_call.1} parent=11 // pred_region
          %s250 = ssub.s32 2048, 2048
          %251 = vsyncadd [#allocation8], %s250
          %s252 = sshll.u32 [#allocation9], 4
          %s253 = int_to_ptr.vmem [resolvable:$true] %s252
          %258 = dma.hbm_to_vmem [thread:$0]  %s3, 2048, %s253, [#allocation8], 64, 64, 4
        $region24: #{tpu_custom_call.1} parent=11 // pred_fallthru
          _
        // Predicated region
        $region25: #{tpu_custom_call.1} parent=11 // pred_check
          %p259 = pneg %p145
        $region26: #{tpu_custom_call.1} parent=11 // pred_check_branch
          %261 = sbr.rel (%p259) target = $region28
        $region27: #{tpu_custom_call.1} parent=11 // pred_region
          _
        $region28: #{tpu_custom_call.1} parent=11 // pred_fallthru
          _
        // Predicated region
        $region29: #{tpu_custom_call.1} parent=11 // pred_check
          %p262 = pneg %p166
        $region30: #{tpu_custom_call.1} parent=11 // pred_check_branch
          %264 = sbr.rel (%p262) target = $region32
        $region31: #{tpu_custom_call.1} parent=11 // pred_region
          %s266 = ssub.s32 1024, 1024
          %267 = vsyncadd [#allocation11], %s266
          %s268 = sshll.u32 [#allocation10], 4
          %s269 = int_to_ptr.vmem [resolvable:$true] %s268
          %274 = dma.hbm_to_vmem [thread:$0]  %s5, 1024, %s269, [#allocation11], 64, 64, 4
        $region32: #{tpu_custom_call.1} parent=11 // pred_fallthru
          _
        // Predicated region
        $region33: #{tpu_custom_call.1} parent=11 // pred_check
          %p275 = pneg %p187
        $region34: #{tpu_custom_call.1} parent=11 // pred_check_branch
          %277 = sbr.rel (%p275) target = $region36
        $region35: #{tpu_custom_call.1} parent=11 // pred_region
          _
        $region36: #{tpu_custom_call.1} parent=11 // pred_fallthru
          _
      $region12: #{tpu_custom_call.1} parent=5 // pred_fallthru
        _
      %p278 = scmp.lt.s32.totalorder %s21, 4
      // Predicated region
      $region37: #{tpu_custom_call.1} parent=5 // pred_check
        %p279 = pneg %p278
      $region38: #{tpu_custom_call.1} parent=5 // pred_check_branch
        %281 = sbr.rel (%p279) target = $region40
      $region39: #{tpu_custom_call.1} parent=5 // pred_region
        // Predicated region
        $region41: #{tpu_custom_call.1} parent=39 // pred_check
          %p282 = pneg %p55
        $region42: #{tpu_custom_call.1} parent=39 // pred_check_branch
          %284 = sbr.rel (%p282) target = $region44
        $region43: #{tpu_custom_call.1} parent=39 // pred_region
          %s285 = sand.u32 %s45, 1
          %s286 = scalar_lea.sflag [#allocation5], %s285
          %s287 = sand.u32 %s45, 1
          %s288 = smul.addr %s287, 16
          %s289 = scalar_lea.vmem [#allocation4], %s288
          %s290 = smul.u32 4, %s29
          %s292 = ssub.s32 256, 256
          %293 = vsyncadd %s286, %s292
          %s294 = smul.addr %s28, 8
          %s295 = sadd.s32 %s290, %s294
          %s296 = smul.addr %s295, 64
          %s297 = scalar_lea.hbm %s0, %s296
          %s298 = sshll.u32 %s289, 4
          %s299 = int_to_ptr.vmem [resolvable:$true] %s298
          %304 = dma.hbm_to_vmem [thread:$0]  %s297, 256, %s299, %s286, 64, 64, 4
        $region44: #{tpu_custom_call.1} parent=39 // pred_fallthru
          _
      $region40: #{tpu_custom_call.1} parent=5 // pred_fallthru
        _
      %p305 = scmp.le.s32.totalorder 1, %s21
      %p306 = scmp.lt.s32.totalorder %s21, 5
      %p307 = pnand %p305, %p306
      %p308 = pneg %p307
      // Predicated region
      $region45: #{tpu_custom_call.1} parent=5 // pred_check
        _
      $region46: #{tpu_custom_call.1} parent=5 // pred_check_branch
        %310 = sbr.rel (%p307) target = $region48
      $region47: #{tpu_custom_call.1} parent=5 // pred_region
        %s311 = ssub.s32 %s21, 1
        %s312 = sand.u32 %s48, 1
        %s313 = scalar_lea.sflag [#allocation5], %s312
        %s314 = sand.u32 %s48, 1
        %s315 = smul.addr %s314, 16
        %s316 = scalar_lea.vmem [#allocation4], %s315
        // Predicated region
        $region49: #{tpu_custom_call.1} parent=47 // pred_check
          %p317 = pneg %p61
        $region50: #{tpu_custom_call.1} parent=47 // pred_check_branch
          %319 = sbr.rel (%p317) target = $region52
        $region51: #{tpu_custom_call.1} parent=47 // pred_region
          %320 = dma.done %s313, 256
        $region52: #{tpu_custom_call.1} parent=47 // pred_fallthru
          _
        // Predicated region
        $region53: #{tpu_custom_call.1} parent=47 // pred_check
          %p321 = pneg %p82
        $region54: #{tpu_custom_call.1} parent=47 // pred_check_branch
          %323 = sbr.rel (%p321) target = $region56
        $region55: #{tpu_custom_call.1} parent=47 // pred_region
          %324 = dma.done [#allocation8], 2048
        $region56: #{tpu_custom_call.1} parent=47 // pred_fallthru
          _
        // Predicated region
        $region57: #{tpu_custom_call.1} parent=47 // pred_check
          %p325 = pneg %p124
        $region58: #{tpu_custom_call.1} parent=47 // pred_check_branch
          %327 = sbr.rel (%p325) target = $region60
        $region59: #{tpu_custom_call.1} parent=47 // pred_region
          %328 = dma.done [#allocation8], 2048
        $region60: #{tpu_custom_call.1} parent=47 // pred_fallthru
          _
        // Predicated region
        $region61: #{tpu_custom_call.1} parent=47 // pred_check
          %p329 = pneg %p166
        $region62: #{tpu_custom_call.1} parent=47 // pred_check_branch
          %331 = sbr.rel (%p329) target = $region64
        $region63: #{tpu_custom_call.1} parent=47 // pred_region
          %332 = dma.done [#allocation11], 1024
        $region64: #{tpu_custom_call.1} parent=47 // pred_fallthru
          _
        %s333 = sand.u32 %s48, 1
        %s334 = scalar_lea.sflag [#allocation5], %s333
        %s335 = sand.u32 %s48, 1
        %s336 = smul.addr %s335, 16
        %s337 = scalar_lea.vmem [#allocation4], %s336
        %p338 = pneg %p61
        %p339 = pneg %p58
        %p340 = pneg %p82
        %p341 = pneg %p79
        %p342 = pneg %p103
        %p343 = pneg %p100
        %p344 = pneg %p124
        %p345 = pneg %p121
        %p346 = pneg %p145
        %p347 = pneg %p142
        %p348 = pneg %p166
        %p349 = pneg %p163
        %p350 = pneg %p187
        %p351 = pneg %p184
        %p352 = pneg %p215
        %p353 = pneg %p212
        %s354 = sand.u32 %s202, 1
        %s355 = scalar_lea.sflag [#allocation6], %s354
        %s356 = sand.u32 %s202, 1
        %s357 = smul.addr %s356, 16
        %s358 = scalar_lea.vmem [#allocation12], %s357
        %s359 = smul.u32 4, %s31
        %s360 = smul.u32 4, %s31
        %v362 = vld [vmem:[%s316] sm:$0xf]
        %v363 = vld [vmem:[%s316 + $0x4] sm:$0xf]
        %v364 = vld [vmem:[%s316 + $0x8] sm:$0xf]
        %v365 = vld [vmem:[%s316 + $0xc] sm:$0xf]
        %p366 = scmp.eq.s32.totalorder %s31, 0
        // Predicated region
        $region65: #{tpu_custom_call.1} parent=47 // pred_check
          %p367 = pneg %p366
        $region66: #{tpu_custom_call.1} parent=47 // pred_check_branch
          %369 = sbr.rel (%p367) target = $region68
        $region67: #{tpu_custom_call.1} parent=47 // pred_region
          %370 = vst [vmem:[#allocation2] sm:$0xff] 0
          %371 = vst [vmem:[#allocation3] sm:$0xff] 0
        $region68: #{tpu_custom_call.1} parent=47 // pred_fallthru
          _
        %v376 = vunpack.c.l.b16 %v362
        %v377 = vunpack.c.l.b16 %v363
        %v378 = vunpack.c.l.b16 %v364
        %v379 = vunpack.c.l.b16 %v365
        %v380 = vpack.c.b16 %v377, %v376
        %v381 = vpack.c.b16 %v379, %v378
        %384 = vst [vmem:[#allocation2 + $0x8] sm:$0xff] %v380
        %385 = vst [vmem:[#allocation2 + $0x10] sm:$0xff] %v381
        %v386 = vld [vmem:[#allocation2] sm:$0x80]
        %v387 = vld [vmem:[#allocation2 + $0x8] sm:$0xff]
        %v388 = vld [vmem:[#allocation2 + $0x10] sm:$0xff]
        %v389 = vld [vmem:[#allocation7] sm:$0xf]
        %v390 = vld [vmem:[#allocation7 + $0x4] sm:$0xf]
        %v391 = vld [vmem:[#allocation7 + $0x8] sm:$0xf]
        %v392 = vld [vmem:[#allocation7 + $0xc] sm:$0xf]
        %v393 = vld [vmem:[#allocation7 + $0x10] sm:$0xf]
        %v394 = vld [vmem:[#allocation7 + $0x14] sm:$0xf]
        %v395 = vld [vmem:[#allocation7 + $0x18] sm:$0xf]
        %v396 = vld [vmem:[#allocation7 + $0x1c] sm:$0xf]
        %v397 = vld [vmem:[#allocation7 + $0x20] sm:$0xf]
        %v398 = vld [vmem:[#allocation7 + $0x24] sm:$0xf]
        %v399 = vld [vmem:[#allocation7 + $0x28] sm:$0xf]
        %v400 = vld [vmem:[#allocation7 + $0x2c] sm:$0xf]
        %v401 = vld [vmem:[#allocation7 + $0x30] sm:$0xf]
        %v402 = vld [vmem:[#allocation7 + $0x34] sm:$0xf]
        %v403 = vld [vmem:[#allocation7 + $0x38] sm:$0xf]
        %v404 = vld [vmem:[#allocation7 + $0x3c] sm:$0xf]
        %s405 = scalar_lea.vmem [#allocation7], 64
        %v406 = vld [vmem:[%s405] sm:$0xf]
        %v407 = vld [vmem:[%s405 + $0x4] sm:$0xf]
        %v408 = vld [vmem:[%s405 + $0x8] sm:$0xf]
        %v409 = vld [vmem:[%s405 + $0xc] sm:$0xf]
        %v410 = vld [vmem:[%s405 + $0x10] sm:$0xf]
        %v411 = vld [vmem:[%s405 + $0x14] sm:$0xf]
        %v412 = vld [vmem:[%s405 + $0x18] sm:$0xf]
        %v413 = vld [vmem:[%s405 + $0x1c] sm:$0xf]
        %v414 = vld [vmem:[%s405 + $0x20] sm:$0xf]
        %v415 = vld [vmem:[%s405 + $0x24] sm:$0xf]
        %v416 = vld [vmem:[%s405 + $0x28] sm:$0xf]
        %v417 = vld [vmem:[%s405 + $0x2c] sm:$0xf]
        %v418 = vld [vmem:[%s405 + $0x30] sm:$0xf]
        %v419 = vld [vmem:[%s405 + $0x34] sm:$0xf]
        %v420 = vld [vmem:[%s405 + $0x38] sm:$0xf]
        %v421 = vld [vmem:[%s405 + $0x3c] sm:$0xf]
        %v438 = vunpack.c.l.b16 %v406
        %v439 = vunpack.c.l.b16 %v407
        %v440 = vunpack.c.l.b16 %v408
        %v441 = vunpack.c.l.b16 %v409
        %v442 = vunpack.c.l.b16 %v410
        %v443 = vunpack.c.l.b16 %v411
        %v444 = vunpack.c.l.b16 %v412
        %v445 = vunpack.c.l.b16 %v413
        %v446 = vunpack.c.l.b16 %v414
        %v447 = vunpack.c.l.b16 %v415
        %v448 = vunpack.c.l.b16 %v416
        %v449 = vunpack.c.l.b16 %v417
        %v450 = vunpack.c.l.b16 %v418
        %v451 = vunpack.c.l.b16 %v419
        %v452 = vunpack.c.l.b16 %v420
        %v453 = vunpack.c.l.b16 %v421
        %v454 = vpack.c.b16 %v439, %v438
        %v455 = vpack.c.b16 %v441, %v440
        %v456 = vpack.c.b16 %v443, %v442
        %v457 = vpack.c.b16 %v445, %v444
        %v458 = vpack.c.b16 %v447, %v446
        %v459 = vpack.c.b16 %v449, %v448
        %v460 = vpack.c.b16 %v451, %v450
        %v461 = vpack.c.b16 %v453, %v452
        %470 = vmatprep.subr.bf16.mxu0 0
        %471 = vmatpush1.bf16.msra.mxu0 %v454
        %472 = vmatprep.subr.bf16.mxu0 0
        %473 = vmatpush1.bf16.msra.mxu0 %v455
        %474 = vmatprep.subr.bf16.mxu0 0
        %475 = vmatpush1.bf16.msra.mxu0 %v456
        %476 = vmatprep.subr.bf16.mxu0 0
        %477 = vmatpush1.bf16.msra.mxu0 %v457
        %478 = vmatprep.subr.bf16.mxu0 0
        %479 = vmatpush1.bf16.msra.mxu0 %v458
        %480 = vmatprep.subr.bf16.mxu0 0
        %481 = vmatpush1.bf16.msra.mxu0 %v459
        %482 = vmatprep.subr.bf16.mxu0 0
        %483 = vmatpush1.bf16.msra.mxu0 %v460
        %484 = vmatprep.subr.bf16.mxu0 0
        %485 = vmatpush1.bf16.msra.mxu0 %v461
        %486 = vmatprep.subr.bf16.mxu0 0
        %487 = vmatpush1.bf16.msra.mxu0 0
        %488 = vmatprep.subr.bf16.mxu0 0
        %489 = vmatpush1.bf16.msra.mxu0 0
        %490 = vmatprep.subr.bf16.mxu0 0
        %491 = vmatpush1.bf16.msra.mxu0 0
        %492 = vmatprep.subr.bf16.mxu0 0
        %493 = vmatpush1.bf16.msra.mxu0 0
        %494 = vmatprep.subr.bf16.mxu0 0
        %495 = vmatpush1.bf16.msra.mxu0 0
        %496 = vmatprep.subr.bf16.mxu0 0
        %497 = vmatpush1.bf16.msra.mxu0 0
        %498 = vmatprep.subr.bf16.mxu0 0
        %499 = vmatpush1.bf16.msra.mxu0 0
        %500 = vmatprep.subr.bf16.mxu0 0
        %501 = vmatpush1.bf16.msra.mxu0 0
        %502 = vmatprep.mubr.bf16.mxu0 0
        %503 = vmatmul.mubr.bf16.gmra.mrb[0].mxu0 %v380
        %v504 = vpop.f32.mrb[0].mxu0
        %v505 = vadd.f32 0.0, %v504
        %v506 = vpop.f32.mrb[0].mxu0
        %v507 = vpop.f32.mrb[0].mxu0
        %v508 = vadd.f32 0.0, %v507
        %v509 = vpop.f32.mrb[0].mxu0
        %510 = vmatprep.mubr.bf16.mxu0 0
        %511 = vmatmul.mubr.bf16.gmra.mrb[0].mxu0 %v381
        %v512 = vpop.f32.mrb[0].mxu0
        %v513 = vadd.f32 0.0, %v512
        %v514 = vpop.f32.mrb[0].mxu0
        %v515 = vpop.f32.mrb[0].mxu0
        %v516 = vadd.f32 0.0, %v515
        %v517 = vpop.f32.mrb[0].mxu0
        %518 = vdwg.mxu0
        %vm519 = vsmask.f32 256
        %v521 = vshrl.u32 %v386, 16
        %v523 = vrot.slane %v521, 7
        %v525 = vshrl.u32 %v387, 16
        %v527 = vrot.slane %v525, 7
        %v528 = vshll.u32 %v387, 16
        %v530 = vor.u32 %v527, %v528
        %v531 = vsel %vm519, %v523, %v530
        %v533 = vshrl.u32 %v388, 16
        %v535 = vrot.slane %v533, 7
        %v536 = vshll.u32 %v388, 16
        %v538 = vor.u32 %v535, %v536
        %v539 = vsel %vm519, %v527, %v538
        %v558 = vunpack.c.l.b16 %v389
        %v559 = vunpack.c.l.b16 %v390
        %v560 = vunpack.c.l.b16 %v391
        %v561 = vunpack.c.l.b16 %v392
        %v562 = vunpack.c.l.b16 %v393
        %v563 = vunpack.c.l.b16 %v394
        %v564 = vunpack.c.l.b16 %v395
        %v565 = vunpack.c.l.b16 %v396
        %v566 = vunpack.c.l.b16 %v397
        %v567 = vunpack.c.l.b16 %v398
        %v568 = vunpack.c.l.b16 %v399
        %v569 = vunpack.c.l.b16 %v400
        %v570 = vunpack.c.l.b16 %v401
        %v571 = vunpack.c.l.b16 %v402
        %v572 = vunpack.c.l.b16 %v403
        %v573 = vunpack.c.l.b16 %v404
        %v574 = vpack.c.b16 %v559, %v558
        %v575 = vpack.c.b16 %v561, %v560
        %v576 = vpack.c.b16 %v563, %v562
        %v577 = vpack.c.b16 %v565, %v564
        %v578 = vpack.c.b16 %v567, %v566
        %v579 = vpack.c.b16 %v569, %v568
        %v580 = vpack.c.b16 %v571, %v570
        %v581 = vpack.c.b16 %v573, %v572
        %590 = vmatprep.subr.bf16.mxu0 0
        %591 = vmatpush1.bf16.msra.mxu0 %v574
        %592 = vmatprep.subr.bf16.mxu0 0
        %593 = vmatpush1.bf16.msra.mxu0 %v575
        %594 = vmatprep.subr.bf16.mxu0 0
        %595 = vmatpush1.bf16.msra.mxu0 %v576
        %596 = vmatprep.subr.bf16.mxu0 0
        %597 = vmatpush1.bf16.msra.mxu0 %v577
        %598 = vmatprep.subr.bf16.mxu0 0
        %599 = vmatpush1.bf16.msra.mxu0 %v578
        %600 = vmatprep.subr.bf16.mxu0 0
        %601 = vmatpush1.bf16.msra.mxu0 %v579
        %602 = vmatprep.subr.bf16.mxu0 0
        %603 = vmatpush1.bf16.msra.mxu0 %v580
        %604 = vmatprep.subr.bf16.mxu0 0
        %605 = vmatpush1.bf16.msra.mxu0 %v581
        %606 = vmatprep.subr.bf16.mxu0 0
        %607 = vmatpush1.bf16.msra.mxu0 0
        %608 = vmatprep.subr.bf16.mxu0 0
        %609 = vmatpush1.bf16.msra.mxu0 0
        %610 = vmatprep.subr.bf16.mxu0 0
        %611 = vmatpush1.bf16.msra.mxu0 0
        %612 = vmatprep.subr.bf16.mxu0 0
        %613 = vmatpush1.bf16.msra.mxu0 0
        %614 = vmatprep.subr.bf16.mxu0 0
        %615 = vmatpush1.bf16.msra.mxu0 0
        %616 = vmatprep.subr.bf16.mxu0 0
        %617 = vmatpush1.bf16.msra.mxu0 0
        %618 = vmatprep.subr.bf16.mxu0 0
        %619 = vmatpush1.bf16.msra.mxu0 0
        %620 = vmatprep.subr.bf16.mxu0 0
        %621 = vmatpush1.bf16.msra.mxu0 0
        %622 = vmatprep.mubr.bf16.mxu0 0
        %623 = vmatmul.mubr.bf16.gmra.mrb[0].mxu0 %v531
        %v624 = vpop.f32.mrb[0].mxu0
        %v625 = vadd.f32 %v505, %v624
        %v626 = vpop.f32.mrb[0].mxu0
        %v627 = vpop.f32.mrb[0].mxu0
        %v628 = vadd.f32 %v508, %v627
        %v629 = vpop.f32.mrb[0].mxu0
        %630 = vmatprep.mubr.bf16.mxu0 0
        %631 = vmatmul.mubr.bf16.gmra.mrb[0].mxu0 %v539
        %v632 = vpop.f32.mrb[0].mxu0
        %v633 = vadd.f32 %v513, %v632
        %v634 = vpop.f32.mrb[0].mxu0
        %v635 = vpop.f32.mrb[0].mxu0
        %v636 = vadd.f32 %v516, %v635
        %v637 = vpop.f32.mrb[0].mxu0
        %638 = vdwg.mxu0
        %v639 = vld [vmem:[%s2] sm:$0x1]
        %v641 = vlaneseq
        %v642 = vshrl.u32 %v641, 7
        %v643 = vsub.s32 0, %v642
        %v644 = vrot.slane %v639, %v643
        %v646 = vadd.f32 %v625, %v644
        %v647 = vadd.f32 %v628, %v644
        %v648 = vadd.f32 %v633, %v644
        %v649 = vadd.f32 %v636, %v644
        %v650 = vmax.f32 %v646, 0.0
        %v651 = vmax.f32 %v647, 0.0
        %v652 = vmax.f32 %v648, 0.0
        %v653 = vmax.f32 %v649, 0.0
        %v654 = vpack.c.bf16 %v651, %v650
        %v655 = vpack.c.bf16 %v653, %v652
        %656 = vst [vmem:[#allocation3 + $0x8] sm:$0xff] %v654
        %657 = vst [vmem:[#allocation3 + $0x10] sm:$0xff] %v655
        %v658 = vld [vmem:[#allocation3] sm:$0x80]
        %v659 = vld [vmem:[#allocation3 + $0x8] sm:$0xff]
        %v660 = vld [vmem:[#allocation3 + $0x10] sm:$0xff]
        %v661 = vld [vmem:[#allocation9] sm:$0xf]
        %v662 = vld [vmem:[#allocation9 + $0x4] sm:$0xf]
        %v663 = vld [vmem:[#allocation9 + $0x8] sm:$0xf]
        %v664 = vld [vmem:[#allocation9 + $0xc] sm:$0xf]
        %v665 = vld [vmem:[#allocation9 + $0x10] sm:$0xf]
        %v666 = vld [vmem:[#allocation9 + $0x14] sm:$0xf]
        %v667 = vld [vmem:[#allocation9 + $0x18] sm:$0xf]
        %v668 = vld [vmem:[#allocation9 + $0x1c] sm:$0xf]
        %v669 = vld [vmem:[#allocation9 + $0x20] sm:$0xf]
        %v670 = vld [vmem:[#allocation9 + $0x24] sm:$0xf]
        %v671 = vld [vmem:[#allocation9 + $0x28] sm:$0xf]
        %v672 = vld [vmem:[#allocation9 + $0x2c] sm:$0xf]
        %v673 = vld [vmem:[#allocation9 + $0x30] sm:$0xf]
        %v674 = vld [vmem:[#allocation9 + $0x34] sm:$0xf]
        %v675 = vld [vmem:[#allocation9 + $0x38] sm:$0xf]
        %v676 = vld [vmem:[#allocation9 + $0x3c] sm:$0xf]
        %s677 = scalar_lea.vmem [#allocation9], 64
        %v678 = vld [vmem:[%s677] sm:$0xf]
        %v679 = vld [vmem:[%s677 + $0x4] sm:$0xf]
        %v680 = vld [vmem:[%s677 + $0x8] sm:$0xf]
        %v681 = vld [vmem:[%s677 + $0xc] sm:$0xf]
        %v682 = vld [vmem:[%s677 + $0x10] sm:$0xf]
        %v683 = vld [vmem:[%s677 + $0x14] sm:$0xf]
        %v684 = vld [vmem:[%s677 + $0x18] sm:$0xf]
        %v685 = vld [vmem:[%s677 + $0x1c] sm:$0xf]
        %v686 = vld [vmem:[%s677 + $0x20] sm:$0xf]
        %v687 = vld [vmem:[%s677 + $0x24] sm:$0xf]
        %v688 = vld [vmem:[%s677 + $0x28] sm:$0xf]
        %v689 = vld [vmem:[%s677 + $0x2c] sm:$0xf]
        %v690 = vld [vmem:[%s677 + $0x30] sm:$0xf]
        %v691 = vld [vmem:[%s677 + $0x34] sm:$0xf]
        %v692 = vld [vmem:[%s677 + $0x38] sm:$0xf]
        %v693 = vld [vmem:[%s677 + $0x3c] sm:$0xf]
        %v710 = vunpack.c.l.b16 %v678
        %v711 = vunpack.c.l.b16 %v679
        %v712 = vunpack.c.l.b16 %v680
        %v713 = vunpack.c.l.b16 %v681
        %v714 = vunpack.c.l.b16 %v682
        %v715 = vunpack.c.l.b16 %v683
        %v716 = vunpack.c.l.b16 %v684
        %v717 = vunpack.c.l.b16 %v685
        %v718 = vunpack.c.l.b16 %v686
        %v719 = vunpack.c.l.b16 %v687
        %v720 = vunpack.c.l.b16 %v688
        %v721 = vunpack.c.l.b16 %v689
        %v722 = vunpack.c.l.b16 %v690
        %v723 = vunpack.c.l.b16 %v691
        %v724 = vunpack.c.l.b16 %v692
        %v725 = vunpack.c.l.b16 %v693
        %v726 = vpack.c.b16 %v711, %v710
        %v727 = vpack.c.b16 %v713, %v712
        %v728 = vpack.c.b16 %v715, %v714
        %v729 = vpack.c.b16 %v717, %v716
        %v730 = vpack.c.b16 %v719, %v718
        %v731 = vpack.c.b16 %v721, %v720
        %v732 = vpack.c.b16 %v723, %v722
        %v733 = vpack.c.b16 %v725, %v724
        %742 = vmatprep.subr.bf16.mxu0 0
        %743 = vmatpush1.bf16.msra.mxu0 %v726
        %744 = vmatprep.subr.bf16.mxu0 0
        %745 = vmatpush1.bf16.msra.mxu0 %v727
        %746 = vmatprep.subr.bf16.mxu0 0
        %747 = vmatpush1.bf16.msra.mxu0 %v728
        %748 = vmatprep.subr.bf16.mxu0 0
        %749 = vmatpush1.bf16.msra.mxu0 %v729
        %750 = vmatprep.subr.bf16.mxu0 0
        %751 = vmatpush1.bf16.msra.mxu0 %v730
        %752 = vmatprep.subr.bf16.mxu0 0
        %753 = vmatpush1.bf16.msra.mxu0 %v731
        %754 = vmatprep.subr.bf16.mxu0 0
        %755 = vmatpush1.bf16.msra.mxu0 %v732
        %756 = vmatprep.subr.bf16.mxu0 0
        %757 = vmatpush1.bf16.msra.mxu0 %v733
        %758 = vmatprep.subr.bf16.mxu0 0
        %759 = vmatpush1.bf16.msra.mxu0 0
        %760 = vmatprep.subr.bf16.mxu0 0
        %761 = vmatpush1.bf16.msra.mxu0 0
        %762 = vmatprep.subr.bf16.mxu0 0
        %763 = vmatpush1.bf16.msra.mxu0 0
        %764 = vmatprep.subr.bf16.mxu0 0
        %765 = vmatpush1.bf16.msra.mxu0 0
        %766 = vmatprep.subr.bf16.mxu0 0
        %767 = vmatpush1.bf16.msra.mxu0 0
        %768 = vmatprep.subr.bf16.mxu0 0
        %769 = vmatpush1.bf16.msra.mxu0 0
        %770 = vmatprep.subr.bf16.mxu0 0
        %771 = vmatpush1.bf16.msra.mxu0 0
        %772 = vmatprep.subr.bf16.mxu0 0
        %773 = vmatpush1.bf16.msra.mxu0 0
        %774 = vmatprep.mubr.bf16.mxu0 0
        %775 = vmatmul.mubr.bf16.gmra.mrb[0].mxu0 %v654
        %v776 = vpop.f32.mrb[0].mxu0
        %v777 = vadd.f32 0.0, %v776
        %v778 = vpop.f32.mrb[0].mxu0
        %v779 = vpop.f32.mrb[0].mxu0
        %v780 = vadd.f32 0.0, %v779
        %v781 = vpop.f32.mrb[0].mxu0
        %782 = vmatprep.mubr.bf16.mxu0 0
        %783 = vmatmul.mubr.bf16.gmra.mrb[0].mxu0 %v655
        %v784 = vpop.f32.mrb[0].mxu0
        %v785 = vadd.f32 0.0, %v784
        %v786 = vpop.f32.mrb[0].mxu0
        %v787 = vpop.f32.mrb[0].mxu0
        %v788 = vadd.f32 0.0, %v787
        %v789 = vpop.f32.mrb[0].mxu0
        %790 = vdwg.mxu0
        %v792 = vshrl.u32 %v658, 16
        %v794 = vrot.slane %v792, 7
        %v796 = vshrl.u32 %v659, 16
        %v798 = vrot.slane %v796, 7
        %v799 = vshll.u32 %v659, 16
        %v801 = vor.u32 %v798, %v799
        %v802 = vsel %vm519, %v794, %v801
        %v804 = vshrl.u32 %v660, 16
        %v806 = vrot.slane %v804, 7
        %v807 = vshll.u32 %v660, 16
        %v809 = vor.u32 %v806, %v807
        %v810 = vsel %vm519, %v798, %v809
        %v829 = vunpack.c.l.b16 %v661
        %v830 = vunpack.c.l.b16 %v662
        %v831 = vunpack.c.l.b16 %v663
        %v832 = vunpack.c.l.b16 %v664
        %v833 = vunpack.c.l.b16 %v665
        %v834 = vunpack.c.l.b16 %v666
        %v835 = vunpack.c.l.b16 %v667
        %v836 = vunpack.c.l.b16 %v668
        %v837 = vunpack.c.l.b16 %v669
        %v838 = vunpack.c.l.b16 %v670
        %v839 = vunpack.c.l.b16 %v671
        %v840 = vunpack.c.l.b16 %v672
        %v841 = vunpack.c.l.b16 %v673
        %v842 = vunpack.c.l.b16 %v674
        %v843 = vunpack.c.l.b16 %v675
        %v844 = vunpack.c.l.b16 %v676
        %v845 = vpack.c.b16 %v830, %v829
        %v846 = vpack.c.b16 %v832, %v831
        %v847 = vpack.c.b16 %v834, %v833
        %v848 = vpack.c.b16 %v836, %v835
        %v849 = vpack.c.b16 %v838, %v837
        %v850 = vpack.c.b16 %v840, %v839
        %v851 = vpack.c.b16 %v842, %v841
        %v852 = vpack.c.b16 %v844, %v843
        %861 = vmatprep.subr.bf16.mxu0 0
        %862 = vmatpush1.bf16.msra.mxu0 %v845
        %863 = vmatprep.subr.bf16.mxu0 0
        %864 = vmatpush1.bf16.msra.mxu0 %v846
        %865 = vmatprep.subr.bf16.mxu0 0
        %866 = vmatpush1.bf16.msra.mxu0 %v847
        %867 = vmatprep.subr.bf16.mxu0 0
        %868 = vmatpush1.bf16.msra.mxu0 %v848
        %869 = vmatprep.subr.bf16.mxu0 0
        %870 = vmatpush1.bf16.msra.mxu0 %v849
        %871 = vmatprep.subr.bf16.mxu0 0
        %872 = vmatpush1.bf16.msra.mxu0 %v850
        %873 = vmatprep.subr.bf16.mxu0 0
        %874 = vmatpush1.bf16.msra.mxu0 %v851
        %875 = vmatprep.subr.bf16.mxu0 0
        %876 = vmatpush1.bf16.msra.mxu0 %v852
        %877 = vmatprep.subr.bf16.mxu0 0
        %878 = vmatpush1.bf16.msra.mxu0 0
        %879 = vmatprep.subr.bf16.mxu0 0
        %880 = vmatpush1.bf16.msra.mxu0 0
        %881 = vmatprep.subr.bf16.mxu0 0
        %882 = vmatpush1.bf16.msra.mxu0 0
        %883 = vmatprep.subr.bf16.mxu0 0
        %884 = vmatpush1.bf16.msra.mxu0 0
        %885 = vmatprep.subr.bf16.mxu0 0
        %886 = vmatpush1.bf16.msra.mxu0 0
        %887 = vmatprep.subr.bf16.mxu0 0
        %888 = vmatpush1.bf16.msra.mxu0 0
        %889 = vmatprep.subr.bf16.mxu0 0
        %890 = vmatpush1.bf16.msra.mxu0 0
        %891 = vmatprep.subr.bf16.mxu0 0
        %892 = vmatpush1.bf16.msra.mxu0 0
        %893 = vmatprep.mubr.bf16.mxu0 0
        %894 = vmatmul.mubr.bf16.gmra.mrb[0].mxu0 %v802
        %v895 = vpop.f32.mrb[0].mxu0
        %v896 = vadd.f32 %v777, %v895
        %v897 = vpop.f32.mrb[0].mxu0
        %v898 = vpop.f32.mrb[0].mxu0
        %v899 = vadd.f32 %v780, %v898
        %v900 = vpop.f32.mrb[0].mxu0
        %901 = vmatprep.mubr.bf16.mxu0 0
        %902 = vmatmul.mubr.bf16.gmra.mrb[0].mxu0 %v810
        %v903 = vpop.f32.mrb[0].mxu0
        %v904 = vadd.f32 %v785, %v903
        %v905 = vpop.f32.mrb[0].mxu0
        %v906 = vpop.f32.mrb[0].mxu0
        %v907 = vadd.f32 %v788, %v906
        %v908 = vpop.f32.mrb[0].mxu0
        %909 = vdwg.mxu0
        %v910 = vld [vmem:[%s4] sm:$0x1]
        %v912 = vlaneseq
        %v913 = vshrl.u32 %v912, 7
        %v914 = vsub.s32 0, %v913
        %v915 = vrot.slane %v910, %v914
        %v917 = vadd.f32 %v896, %v915
        %v918 = vadd.f32 %v899, %v915
        %v919 = vadd.f32 %v904, %v915
        %v920 = vadd.f32 %v907, %v915
        %v921 = vmax.f32 %v917, 0.0
        %v922 = vmax.f32 %v918, 0.0
        %v923 = vmax.f32 %v919, 0.0
        %v924 = vmax.f32 %v920, 0.0
        %v925 = vld [vmem:[#allocation10] sm:$0xf]
        %v926 = vld [vmem:[#allocation10 + $0x4] sm:$0xf]
        %v927 = vld [vmem:[#allocation10 + $0x8] sm:$0xf]
        %v928 = vld [vmem:[#allocation10 + $0xc] sm:$0xf]
        %v929 = vld [vmem:[#allocation10 + $0x10] sm:$0xf]
        %v930 = vld [vmem:[#allocation10 + $0x14] sm:$0xf]
        %v931 = vld [vmem:[#allocation10 + $0x18] sm:$0xf]
        %v932 = vld [vmem:[#allocation10 + $0x1c] sm:$0xf]
        %v933 = vld [vmem:[#allocation10 + $0x20] sm:$0xf]
        %v934 = vld [vmem:[#allocation10 + $0x24] sm:$0xf]
        %v935 = vld [vmem:[#allocation10 + $0x28] sm:$0xf]
        %v936 = vld [vmem:[#allocation10 + $0x2c] sm:$0xf]
        %v937 = vld [vmem:[#allocation10 + $0x30] sm:$0xf]
        %v938 = vld [vmem:[#allocation10 + $0x34] sm:$0xf]
        %v939 = vld [vmem:[#allocation10 + $0x38] sm:$0xf]
        %v940 = vld [vmem:[#allocation10 + $0x3c] sm:$0xf]
        %v941 = vld [vmem:[%s6] sm:$0x1]
        %v943 = vlaneseq
        %v944 = vshrl.u32 %v943, 7
        %v945 = vsub.s32 0, %v944
        %v946 = vrot.slane %v941, %v945
        %v964 = vunpack.c.l.b16 %v925
        %v965 = vunpack.c.l.b16 %v926
        %v966 = vunpack.c.l.b16 %v927
        %v967 = vunpack.c.l.b16 %v928
        %v968 = vunpack.c.l.b16 %v929
        %v969 = vunpack.c.l.b16 %v930
        %v970 = vunpack.c.l.b16 %v931
        %v971 = vunpack.c.l.b16 %v932
        %v972 = vunpack.c.l.b16 %v933
        %v973 = vunpack.c.l.b16 %v934
        %v974 = vunpack.c.l.b16 %v935
        %v975 = vunpack.c.l.b16 %v936
        %v976 = vunpack.c.l.b16 %v937
        %v977 = vunpack.c.l.b16 %v938
        %v978 = vunpack.c.l.b16 %v939
        %v979 = vunpack.c.l.b16 %v940
        %v980 = vpack.c.b16 %v965, %v964
        %v981 = vpack.c.b16 %v967, %v966
        %v982 = vpack.c.b16 %v969, %v968
        %v983 = vpack.c.b16 %v971, %v970
        %v984 = vpack.c.b16 %v973, %v972
        %v985 = vpack.c.b16 %v975, %v974
        %v986 = vpack.c.b16 %v977, %v976
        %v987 = vpack.c.b16 %v979, %v978
        %996 = vmatprep.subr.bf16.mxu0 0
        %997 = vmatpush1.bf16.msra.mxu0 %v980
        %998 = vmatprep.subr.bf16.mxu0 0
        %999 = vmatpush1.bf16.msra.mxu0 %v981
        %1000 = vmatprep.subr.bf16.mxu0 0
        %1001 = vmatpush1.bf16.msra.mxu0 %v982
        %1002 = vmatprep.subr.bf16.mxu0 0
        %1003 = vmatpush1.bf16.msra.mxu0 %v983
        %1004 = vmatprep.subr.bf16.mxu0 0
        %1005 = vmatpush1.bf16.msra.mxu0 %v984
        %1006 = vmatprep.subr.bf16.mxu0 0
        %1007 = vmatpush1.bf16.msra.mxu0 %v985
        %1008 = vmatprep.subr.bf16.mxu0 0
        %1009 = vmatpush1.bf16.msra.mxu0 %v986
        %1010 = vmatprep.subr.bf16.mxu0 0
        %1011 = vmatpush1.bf16.msra.mxu0 %v987
        %1012 = vmatprep.subr.bf16.mxu0 0
        %1013 = vmatpush1.bf16.msra.mxu0 0
        %1014 = vmatprep.subr.bf16.mxu0 0
        %1015 = vmatpush1.bf16.msra.mxu0 0
        %1016 = vmatprep.subr.bf16.mxu0 0
        %1017 = vmatpush1.bf16.msra.mxu0 0
        %1018 = vmatprep.subr.bf16.mxu0 0
        %1019 = vmatpush1.bf16.msra.mxu0 0
        %1020 = vmatprep.subr.bf16.mxu0 0
        %1021 = vmatpush1.bf16.msra.mxu0 0
        %1022 = vmatprep.subr.bf16.mxu0 0
        %1023 = vmatpush1.bf16.msra.mxu0 0
        %1024 = vmatprep.subr.bf16.mxu0 0
        %1025 = vmatpush1.bf16.msra.mxu0 0
        %1026 = vmatprep.subr.bf16.mxu0 0
        %1027 = vmatpush1.bf16.msra.mxu0 0
        %1028 = vmatprep.mubr.bf16.mxu0 0
        %1029 = vmatmul.mubr.bf16.gmra.mrb[0].mxu0 %v380
        %v1030 = vpop.f32.mrb[0].mxu0
        %v1031 = vadd.f32 %v946, %v1030
        %v1032 = vpop.f32.mrb[0].mxu0
        %v1033 = vpop.f32.mrb[0].mxu0
        %v1034 = vadd.f32 %v946, %v1033
        %v1035 = vpop.f32.mrb[0].mxu0
        %1036 = vmatprep.mubr.bf16.mxu0 0
        %1037 = vmatmul.mubr.bf16.gmra.mrb[0].mxu0 %v381
        %v1038 = vpop.f32.mrb[0].mxu0
        %v1039 = vadd.f32 %v946, %v1038
        %v1040 = vpop.f32.mrb[0].mxu0
        %v1041 = vpop.f32.mrb[0].mxu0
        %v1042 = vadd.f32 %v946, %v1041
        %v1043 = vpop.f32.mrb[0].mxu0
        %1044 = vdwg.mxu0
        %v1045 = vadd.f32 %v921, %v1031
        %v1046 = vadd.f32 %v922, %v1034
        %v1047 = vadd.f32 %v923, %v1039
        %v1048 = vadd.f32 %v924, %v1042
        %v1049 = vmax.f32 %v1045, 0.0
        %v1050 = vmax.f32 %v1046, 0.0
        %v1051 = vmax.f32 %v1047, 0.0
        %v1052 = vmax.f32 %v1048, 0.0
        %v1053 = vpack.c.bf16 %v1050, %v1049
        %v1054 = vpack.c.bf16 %v1052, %v1051
        %v1057 = vunpack.c.l.b16 %v1053
        %v1058 = vunpack.c.h.b16 %v1053
        %v1059 = vunpack.c.l.b16 %v1054
        %v1060 = vunpack.c.h.b16 %v1054
        %v1061 = vpack.c.b16 %v1057, %v1057
        %v1062 = vpack.c.b16 %v1058, %v1058
        %v1063 = vpack.c.b16 %v1059, %v1059
        %v1064 = vpack.c.b16 %v1060, %v1060
        %1069 = vst [vmem:[%s358] sm:$0xf] %v1061
        %1070 = vst [vmem:[%s358 + $0x4] sm:$0xf] %v1062
        %1071 = vst [vmem:[%s358 + $0x8] sm:$0xf] %v1063
        %1072 = vst [vmem:[%s358 + $0xc] sm:$0xf] %v1064
        %s1073 = sadd.s32 %s31, 1
        %p1074 = scmp.lt.s32.totalorder %s1073, 2
        // Predicated region
        $region69: #{tpu_custom_call.1} parent=47 // pred_check
          %p1075 = pneg %p1074
        $region70: #{tpu_custom_call.1} parent=47 // pred_check_branch
          %1077 = sbr.rel (%p1075) target = $region72
        $region71: #{tpu_custom_call.1} parent=47 // pred_region
          %1078 = vst [vmem:[#allocation2] sm:$0xff] %v381
          %1079 = vst [vmem:[#allocation3] sm:$0xff] %v655
        $region72: #{tpu_custom_call.1} parent=47 // pred_fallthru
          _
        %s1080 = sand.u32 %s202, 1
        %s1081 = scalar_lea.sflag [#allocation6], %s1080
        %s1082 = sand.u32 %s202, 1
        %s1083 = smul.addr %s1082, 16
        %s1084 = scalar_lea.vmem [#allocation12], %s1083
        // Predicated region
        $region73: #{tpu_custom_call.1} parent=47 // pred_check
          %p1085 = pneg %p212
        $region74: #{tpu_custom_call.1} parent=47 // pred_check_branch
          %1087 = sbr.rel (%p1085) target = $region76
        $region75: #{tpu_custom_call.1} parent=47 // pred_region
          %s1088 = smul.u32 4, %s31
          %s1090 = ssub.s32 256, 256
          %1091 = vsyncadd %s1081, %s1090
          %s1092 = smul.addr %s30, 8
          %s1093 = sadd.s32 %s1088, %s1092
          %s1094 = smul.addr %s1093, 64
          %s1095 = scalar_lea.hbm %s7, %s1094
          %s1096 = sshll.u32 %s1084, 4
          %s1097 = int_to_ptr.vmem [resolvable:$true] %s1096
          %1102 = dma.vmem_to_hbm [thread:$0]  %s1097, 256, %s1095, %s1081, 64, 64, 4
        $region76: #{tpu_custom_call.1} parent=47 // pred_fallthru
          _
      $region48: #{tpu_custom_call.1} parent=5 // pred_fallthru
        _
      %p1103 = scmp.le.s32.totalorder 2, %s21
      // Predicated region
      $region77: #{tpu_custom_call.1} parent=5 // pred_check
        %p1104 = pneg %p1103
      $region78: #{tpu_custom_call.1} parent=5 // pred_check_branch
        %1106 = sbr.rel (%p1104) target = $region80
      $region79: #{tpu_custom_call.1} parent=5 // pred_region
        %s1107 = ssub.s32 %s21, 2
        // Predicated region
        $region81: #{tpu_custom_call.1} parent=79 // pred_check
          %p1108 = pneg %p218
        $region82: #{tpu_custom_call.1} parent=79 // pred_check_branch
          %1110 = sbr.rel (%p1108) target = $region84
        $region83: #{tpu_custom_call.1} parent=79 // pred_region
          %s1111 = sand.u32 %s203, 1
          %s1112 = scalar_lea.sflag [#allocation6], %s1111
          %s1113 = sand.u32 %s203, 1
          %s1114 = smul.addr %s1113, 16
          %s1115 = scalar_lea.vmem [#allocation12], %s1114
          %1116 = dma.done %s1112, 256
        $region84: #{tpu_custom_call.1} parent=79 // pred_fallthru
          _
      $region80: #{tpu_custom_call.1} parent=5 // pred_fallthru
        _
    $region6: #{tpu_custom_call.1} parent=1 // loop_footer
      %s25 = sadd.s32 1, %s21
    $region7: #{tpu_custom_call.1} parent=1 // loop_footer_branch
      %20 = sbr.rel target = $region3
    $region8: #{tpu_custom_call.1} parent=1 // loop_exit
      _
    %1117 = vsyncpa [#allocation5], 1
    %s1118 = scalar_lea.sflag [#allocation5], 1
    %1119 = vsyncpa %s1118, 1
    %1120 = vsyncpa [#allocation8], 1
    %1121 = vsyncpa [#allocation11], 1
    %1122 = vsyncpa [#allocation6], 1
    %s1123 = scalar_lea.sflag [#allocation6], 1
    %1124 = vsyncpa %s1123, 1

</llo_original>
